<compile_context>
chip_gen: v5e
topology: v5e:2x2
jax: 0.10.0
libtpu: 0.0.40
codegen_flags: <defaults>
</compile_context>

<pallas_src>
import functools

import jax
import jax.numpy as jnp
from jax import lax
from jax.experimental import pallas as pl
from jax.experimental.pallas import tpu as pltpu

_LANE = 128
_BLOCK_ROWS = 1024   # (1024, 128) f32 tile = 512 KiB/buffer; fits every chip's scoped VMEM
_NUM_CORES = 2       # leading "parallel" grid axis -> both TensorCores on v7x


def _l1_sum_kernel(p_ref, g_ref, o_ref, acc_ref, *,
                   rows_valid, block_rows, blocks_per_core):
    c = pl.program_id(0)
    i = pl.program_id(1)

    @pl.when(i == 0)
    def _():
        acc_ref[...] = jnp.zeros_like(acc_ref)

    d = jnp.abs(p_ref[...].astype(jnp.float32) - g_ref[...].astype(jnp.float32))
    row0 = (c * blocks_per_core + i) * block_rows
    row_ids = row0 + lax.broadcasted_iota(jnp.int32, d.shape, 0)
    acc_ref[...] += jnp.where(row_ids < rows_valid, d, 0.0)

    @pl.when(i == pl.num_programs(1) - 1)
    def _():
        # Fold the block-shaped accumulator down to one (1, 8, 128) partial
        # (tile-aligned reshape + leading-axis sum: cheap vreg adds, done once).
        part = acc_ref[...].reshape(block_rows // 8, 8, _LANE)
        o_ref[...] = jnp.sum(part, axis=0, keepdims=True)


def _l1_masked_sum_kernel(p_ref, g_ref, m_ref, o_ref, acc_ref, *,
                          rows_valid, block_rows, blocks_per_core):
    c = pl.program_id(0)
    i = pl.program_id(1)

    @pl.when(i == 0)
    def _():
        acc_ref[...] = jnp.zeros_like(acc_ref)

    m = m_ref[...].astype(jnp.float32)
    d = jnp.abs((p_ref[...].astype(jnp.float32) -
                 g_ref[...].astype(jnp.float32)) * m)
    row0 = (c * blocks_per_core + i) * block_rows
    row_ids = row0 + lax.broadcasted_iota(jnp.int32, d.shape, 0)
    acc_ref[...] += jnp.where(row_ids < rows_valid, d, 0.0)

    @pl.when(i == pl.num_programs(1) - 1)
    def _():
        part = acc_ref[...].reshape(block_rows // 8, 8, _LANE)
        o_ref[...] = jnp.sum(part, axis=0, keepdims=True)


def _to_lanes(x):
    """Flatten (no copy for contiguous arrays), zero-pad ONLY if the size is not
    a multiple of 8*128, and reshape to a lane-dense (rows, 128) slab in the
    native dtype.  Zero padding contributes 0 to the L1 sum."""
    flat = jnp.ravel(x)
    n = flat.shape[0]
    pad = (-n) % (8 * _LANE)
    if pad:
        # TODO(synk): ragged tail costs one pad copy; could instead mask the
        # tail lanes in-kernel to stay fully copy-free.
        flat = jnp.pad(flat, (0, pad))
    return flat.reshape(-1, _LANE), n


@functools.partial(jax.jit, static_argnames=("reduction",))
def l1_loss(pred, gt, mask=None, reduction="mean"):
    """Pallas implementation of l1Loss.forward (L1 loss with optional mask)."""
    if reduction not in ("mean", "sum"):
        # TODO(synk): reduction='none' (elementwise output) not wired up here.
        raise NotImplementedError("only 'mean' and 'sum' reductions supported")

    p2d, n_elems = _to_lanes(pred)
    g2d, _ = _to_lanes(gt)
    rows = p2d.shape[0]                      # always a multiple of 8

    block_rows = min(_BLOCK_ROWS, rows)      # multiple of 8, <= rows
    n_row_blocks = -(-rows // block_rows)
    blocks_per_core = -(-n_row_blocks // _NUM_CORES)
    grid = (_NUM_CORES, blocks_per_core)

    def tile_map(c, i):
        # Clamp so out-of-range block indices (from the core split) re-read an
        # in-bounds block; the in-kernel row mask zeroes their contribution.
        return (jnp.minimum(c * blocks_per_core + i, n_row_blocks - 1), 0)

    tile_spec = pl.BlockSpec((block_rows, _LANE), tile_map)
    out_spec = pl.BlockSpec((1, 8, _LANE), lambda c, i: (c, 0, 0))
    scratch = [pltpu.VMEM((block_rows, _LANE), jnp.float32)]
    cparams = pltpu.CompilerParams(
        dimension_semantics=("parallel", "arbitrary"))
    out_shape = jax.ShapeDtypeStruct((_NUM_CORES, 8, _LANE), jnp.float32)

    kern_kw = dict(rows_valid=rows, block_rows=block_rows,
                   blocks_per_core=blocks_per_core)

    if mask is None:
        kernel = functools.partial(_l1_sum_kernel, **kern_kw)
        in_specs = [tile_spec, tile_spec]
        operands = (p2d, g2d)
    else:
        if mask.dtype == jnp.bool_:
            mask = mask.astype(jnp.float32)
        if mask.shape != pred.shape:
            # TODO(synk): broadcastable masks are materialized full-size here.
            mask = jnp.broadcast_to(mask, pred.shape)
        m2d, _ = _to_lanes(mask)
        kernel = functools.partial(_l1_masked_sum_kernel, **kern_kw)
        in_specs = [tile_spec, tile_spec, tile_spec]
        operands = (p2d, g2d, m2d)

    partials = pl.pallas_call(
        kernel,
        out_shape=out_shape,
        grid_spec=pltpu.PrefetchScalarGridSpec(
            num_scalar_prefetch=0,
            grid=grid,
            in_specs=in_specs,
            out_specs=out_spec,
            scratch_shapes=scratch,
        ),
        compiler_params=cparams,
    )(*operands)

    total = jnp.sum(partials)
    if reduction == "mean":
        return total / jnp.float32(n_elems)
    return total


if __name__ == "__main__":
    key = jax.random.PRNGKey(0)
    k1, k2, k3, k4, k5 = jax.random.split(key, 5)

    # Small NCHW tensors, consistent with typical DBVI usage.
    shape = (2, 4, 16, 16)
    pred = jax.random.normal(k1, shape, dtype=jnp.float32)
    gt = jax.random.normal(k2, shape, dtype=jnp.float32)
    mask = (jax.random.uniform(k3, shape) > 0.5).astype(jnp.float32)

    # Unmasked mean L1.
    out = jax.block_until_ready(l1_loss(pred, gt, None, reduction="mean"))
    ref = jnp.mean(jnp.abs(pred - gt))
    assert jnp.allclose(out, ref, rtol=1e-5, atol=1e-6), (out, ref)

    # Masked mean L1 (module semantics: l1_loss(pred*mask, gt*mask), mean over numel).
    out_m = jax.block_until_ready(l1_loss(pred, gt, mask, reduction="mean"))
    ref_m = jnp.mean(jnp.abs(pred * mask - gt * mask))
    assert jnp.allclose(out_m, ref_m, rtol=1e-5, atol=1e-6), (out_m, ref_m)

    # Sum reduction.
    out_s = jax.block_until_ready(l1_loss(pred, gt, None, reduction="sum"))
    ref_s = jnp.sum(jnp.abs(pred - gt))
    assert jnp.allclose(out_s, ref_s, rtol=1e-5, atol=1e-4), (out_s, ref_s)

    # bf16 inputs stream through the kernel in native dtype (no wrapper upcast).
    pred_bf = pred.astype(jnp.bfloat16)
    gt_bf = gt.astype(jnp.bfloat16)
    out_bf = jax.block_until_ready(l1_loss(pred_bf, gt_bf, None, reduction="mean"))
    ref_bf = jnp.mean(jnp.abs(pred_bf.astype(jnp.float32) -
                              gt_bf.astype(jnp.float32)))
    assert jnp.allclose(out_bf, ref_bf, rtol=1e-5, atol=1e-6), (out_bf, ref_bf)

    # Larger shape: exercises both grid cores doing real work plus a partial
    # (masked) tail block.
    shape2 = (2, 8, 96, 128)
    p2 = jax.random.normal(k4, shape2, dtype=jnp.float32)
    g2 = jax.random.normal(k5, shape2, dtype=jnp.float32)
    out2 = jax.block_until_ready(l1_loss(p2, g2, None, reduction="mean"))
    ref2 = jnp.mean(jnp.abs(p2 - g2))
    assert jnp.allclose(out2, ref2, rtol=1e-5, atol=1e-6), (out2, ref2)

    print("KERNEL_OK")
</pallas_src>

<mosaic_0001>
module attributes {stable_mosaic.version = 11 : i64} {
  func.func @_l1_sum_kernel(%arg0: i32, %arg1: i32, %arg2: memref<16x128xf32, #tpu.memory_space<vmem>>, %arg3: memref<16x128xf32, #tpu.memory_space<vmem>>, %arg4: memref<1x8x128xf32, #tpu.memory_space<vmem>>, %arg5: memref<16x128xf32, #tpu.memory_space<vmem>>) attributes {dimension_semantics = [#tpu.dimension_semantics<parallel>, #tpu.dimension_semantics<arbitrary>], iteration_bounds = array<i64: 2, 1>, scalar_prefetch = 0 : i64, scratch_operands = 1 : i64, tpu.core_type = #tpu.core_type<tc>, window_params = [{transform_indices = @transform_0, window_bounds = array<i64: 16, 128>}, {transform_indices = @transform_1, window_bounds = array<i64: 16, 128>}, {transform_indices = @transform_2, window_bounds = array<i64: 1, 8, 128>}]} {
    %c0_i32 = arith.constant 0 : i32
    %0 = arith.cmpi eq, %arg1, %c0_i32 : i32
    %1 = arith.extui %0 : i1 to i32
    %c0_i32_0 = arith.constant 0 : i32
    %2 = arith.cmpi ne, %1, %c0_i32_0 : i32
    scf.if %2 {
      %cst_11 = arith.constant 0.000000e+00 : f32
      %23 = vector.broadcast %cst_11 : f32 to vector<16x128xf32>
      %c0_12 = arith.constant 0 : index
      %c0_13 = arith.constant 0 : index
      %24 = vector.load %arg5[%c0_12, %c0_13] : memref<16x128xf32, #tpu.memory_space<vmem>>, vector<16x128xf32>
      tpu.vector_store %arg5[%c0_12, %c0_13], %23 {strides = array<i32>} : memref<16x128xf32, #tpu.memory_space<vmem>>, vector<16x128xf32>,
    } else {
    }
    %c0 = arith.constant 0 : index
    %c0_1 = arith.constant 0 : index
    %3 = vector.load %arg2[%c0, %c0_1] : memref<16x128xf32, #tpu.memory_space<vmem>>, vector<16x128xf32>
    %c0_2 = arith.constant 0 : index
    %c0_3 = arith.constant 0 : index
    %4 = vector.load %arg3[%c0_2, %c0_3] : memref<16x128xf32, #tpu.memory_space<vmem>>, vector<16x128xf32>
    %5 = arith.subf %3, %4 : vector<16x128xf32>
    %6 = math.absf %5 : vector<16x128xf32>
    %c1_i32 = arith.constant 1 : i32
    %7 = arith.muli %arg0, %c1_i32 : i32
    %8 = arith.addi %7, %arg1 : i32
    %c16_i32 = arith.constant 16 : i32
    %9 = arith.muli %8, %c16_i32 : i32
    %10 = tpu.iota {dimensions = array<i32: 0>} : vector<16x128xi32>
    %11 = vector.broadcast %9 : i32 to vector<16x128xi32>
    %12 = arith.addi %11, %10 : vector<16x128xi32>
    %c0_4 = arith.constant 0 : index
    %c0_5 = arith.constant 0 : index
    %13 = vector.load %arg5[%c0_4, %c0_5] : memref<16x128xf32, #tpu.memory_space<vmem>>, vector<16x128xf32>
    %c16_i32_6 = arith.constant 16 : i32
    %14 = vector.broadcast %c16_i32_6 : i32 to vector<16x128xi32>
    %15 = arith.cmpi slt, %12, %14 : vector<16x128xi32>
    %cst = arith.constant 0.000000e+00 : f32
    %16 = vector.broadcast %cst : f32 to vector<16x128xf32>
    %17 = arith.select %15, %6, %16 : vector<16x128xi1>, vector<16x128xf32>
    %18 = arith.addf %13, %17 : vector<16x128xf32>
    %c0_7 = arith.constant 0 : index
    %c0_8 = arith.constant 0 : index
    %19 = vector.load %arg5[%c0_7, %c0_8] : memref<16x128xf32, #tpu.memory_space<vmem>>, vector<16x128xf32>
    tpu.vector_store %arg5[%c0_7, %c0_8], %18 {strides = array<i32>} : memref<16x128xf32, #tpu.memory_space<vmem>>, vector<16x128xf32>,
    %c0_i32_9 = arith.constant 0 : i32
    %20 = arith.cmpi eq, %arg1, %c0_i32_9 : i32
    %21 = arith.extui %20 : i1 to i32
    %c0_i32_10 = arith.constant 0 : i32
    %22 = arith.cmpi ne, %21, %c0_i32_10 : i32
    scf.if %22 {
      %c0_11 = arith.constant 0 : index
      %c0_12 = arith.constant 0 : index
      %23 = vector.load %arg5[%c0_11, %c0_12] : memref<16x128xf32, #tpu.memory_space<vmem>>, vector<16x128xf32>
      %24 = vector.shape_cast %23 : vector<16x128xf32> to vector<2x8x128xf32>
      %cst_13 = arith.constant dense<0.000000e+00> : vector<8x128xf32>
      %25 = vector.multi_reduction <add>, %24, %cst_13 [0] : vector<2x8x128xf32> to vector<8x128xf32>
      %26 = vector.shape_cast %25 : vector<8x128xf32> to vector<1x8x128xf32>
      %c0_14 = arith.constant 0 : index
      %c0_15 = arith.constant 0 : index
      %c0_16 = arith.constant 0 : index
      %27 = vector.load %arg4[%c0_14, %c0_15, %c0_16] : memref<1x8x128xf32, #tpu.memory_space<vmem>>, vector<1x8x128xf32>
      tpu.vector_store %arg4[%c0_14, %c0_15, %c0_16], %26 {strides = array<i32>} : memref<1x8x128xf32, #tpu.memory_space<vmem>>, vector<1x8x128xf32>,
    } else {
    }
    return
  }
  func.func @transform_0(%arg0: i32, %arg1: i32) -> (i32, i32) {
    %c1_i32 = arith.constant 1 : i32
    %0 = arith.muli %arg0, %c1_i32 : i32
    %1 = arith.addi %0, %arg1 : i32
    %c0_i32 = arith.constant 0 : i32
    %2 = arith.minsi %1, %c0_i32 : i32
    %c0_i32_0 = arith.constant 0 : i32
    %c0_i32_1 = arith.constant 0 : i32
    return %2, %c0_i32_0 : i32, i32
  }
  func.func @transform_1(%arg0: i32, %arg1: i32) -> (i32, i32) {
    %c1_i32 = arith.constant 1 : i32
    %0 = arith.muli %arg0, %c1_i32 : i32
    %1 = arith.addi %0, %arg1 : i32
    %c0_i32 = arith.constant 0 : i32
    %2 = arith.minsi %1, %c0_i32 : i32
    %c0_i32_0 = arith.constant 0 : i32
    %c0_i32_1 = arith.constant 0 : i32
    return %2, %c0_i32_0 : i32, i32
  }
  func.func @transform_2(%arg0: i32, %arg1: i32) -> (i32, i32, i32) {
    %c0_i32 = arith.constant 0 : i32
    %c0_i32_0 = arith.constant 0 : i32
    %c0_i32_1 = arith.constant 0 : i32
    return %arg0, %c0_i32, %c0_i32_0 : i32, i32, i32
  }
}

</mosaic_0001>

<llo_original>
// kernel: l1_loss.1
$region0: #{l1_loss.1}
  #allocation0 [shape = 'u32[]', space=smem, size = 0x4, offset = 0x4, fixed_abs, tag = 'smem constant byte address 0x4 - core index']
  #allocation1 [shape = 'u32[72,128]{1,0:T(1,128)}', space=vmem, size = 0x9000, scoped, tag = 'internal scratch']
  #allocation2 [shape = 'f32[16,128]{1,0:T(8,128)}', space=vmem, size = 0x2000, scoped, tag = 'scratch operand']
  %s0 = inlined_call_operand.vmem [shape: f32[16,128], index: 0, kind: input, shape index: {}]
  %s1 = inlined_call_operand.vmem [shape: f32[16,128], index: 1, kind: input, shape index: {}]
  %s2 = inlined_call_operand.vmem [shape: f32[2,8,128], index: 2, kind: output, shape index: {}]
  %s3 = sld [smem:[#allocation0]]
  $region49: #{l1_loss.1} parent=0
    _
  %s5 = ssub.s32 1, %s3
  %s6 = scalar_select 0, %s5, %s3
  loop: start=0, step=1, limit=4
  $region2: #{l1_loss.1} parent=0 // loop_pre_header
    _
  $region3: #{l1_loss.1} parent=0 // loop_header
    %s8 = sphi 0, %s12
    %p9 = scmp.ge.s32.totalorder %s8, 4
    %s15 = sphi 0, %s27
    %s16 = sphi 0, %s23
    %s17 = sphi 0, %s15
    %s18 = sphi 0, %s16
    %s19 = sphi 0, %s17
    %s20 = sphi 0, %s18
    %s36 = sphi 0, %s38
    %s39 = sphi 0, %s36
    %s40 = sphi 0, %s39
    %s56 = sphi 0, %s40
    %s68 = sphi 0, %s70
    %s71 = sphi 0, %s68
    %s72 = sphi 0, %s71
    %s88 = sphi 0, %s72
    %s94 = sphi 0, %s96
    %s97 = sphi 0, %s94
    %s98 = sphi 0, %s97
    %s114 = sphi 0, %s98
  $region4: #{l1_loss.1} parent=0 // loop_header_branch
    %11 = sbr.rel (%p9) target = $region8
  $region5: #{l1_loss.1} parent=0 // loop_body
    %s13 = ssub.s32 %s8, 1
    %s14 = ssub.s32 %s8, 2
    %s21 = sadd.s32 1, %s16
    %p22 = scmp.ge.s32.totalorder %s21, 1
    %s23 = scalar_select %p22, 0, %s21
    %s24 = sadd.s32 1, %s15
    %s25 = scalar_select %p22, %s24, %s15
    %p26 = scmp.ge.s32.totalorder %s25, 2
    %s27 = scalar_select %p26, 0, %s25
    %s28 = sadd.s32 %s15, %s16
    %p29 = scmp.lt.s32.totalorder %s28, 0
    %s30 = scalar_select %p29, %s28, 0
    %s31 = sadd.s32 %s27, %s23
    %p32 = scmp.lt.s32.totalorder %s31, 0
    %s33 = scalar_select %p32, %s31, 0
    %s34 = ssub.s32 %s30, %s33
    %p35 = scmp.eq.s32.totalorder %s34, 0
    %s37 = sadd.s32 %s36, 1
    %s38 = scalar_select %p35, %s36, %s37
    %p41 = pneg %p35
    %p42 = scmp.eq.s32.totalorder %s8, 1
    %p43 = por %p41, %p42
    %p44 = scmp.ne.s32.totalorder %s36, %s39
    %p45 = scmp.eq.s32.totalorder %s8, 0
    %p46 = por %p44, %p45
    %p47 = scmp.ne.s32.totalorder %s36, %s39
    %p48 = scmp.eq.s32.totalorder %s13, 1
    %p49 = por %p47, %p48
    %p50 = scmp.ne.s32.totalorder %s39, %s40
    %p51 = scmp.eq.s32.totalorder %s13, 0
    %p52 = por %p50, %p51
    %p53 = scmp.ne.s32.totalorder %s39, %s40
    %p54 = scmp.eq.s32.totalorder %s14, 1
    %p55 = por %p53, %p54
    %p57 = scmp.ne.s32.totalorder %s40, %s56
    %p58 = scmp.eq.s32.totalorder %s14, 0
    %p59 = por %p57, %p58
    %s60 = sadd.s32 %s15, %s16
    %p61 = scmp.lt.s32.totalorder %s60, 0
    %s62 = scalar_select %p61, %s60, 0
    %s63 = sadd.s32 %s27, %s23
    %p64 = scmp.lt.s32.totalorder %s63, 0
    %s65 = scalar_select %p64, %s63, 0
    %s66 = ssub.s32 %s62, %s65
    %p67 = scmp.eq.s32.totalorder %s66, 0
    %s69 = sadd.s32 %s68, 1
    %s70 = scalar_select %p67, %s68, %s69
    %p73 = pneg %p67
    %p74 = scmp.eq.s32.totalorder %s8, 1
    %p75 = por %p73, %p74
    %p76 = scmp.ne.s32.totalorder %s68, %s71
    %p77 = scmp.eq.s32.totalorder %s8, 0
    %p78 = por %p76, %p77
    %p79 = scmp.ne.s32.totalorder %s68, %s71
    %p80 = scmp.eq.s32.totalorder %s13, 1
    %p81 = por %p79, %p80
    %p82 = scmp.ne.s32.totalorder %s71, %s72
    %p83 = scmp.eq.s32.totalorder %s13, 0
    %p84 = por %p82, %p83
    %p85 = scmp.ne.s32.totalorder %s71, %s72
    %p86 = scmp.eq.s32.totalorder %s14, 1
    %p87 = por %p85, %p86
    %p89 = scmp.ne.s32.totalorder %s72, %s88
    %p90 = scmp.eq.s32.totalorder %s14, 0
    %p91 = por %p89, %p90
    %s92 = ssub.s32 %s15, %s27
    %p93 = scmp.eq.s32.totalorder %s92, 0
    %s95 = sadd.s32 %s94, 1
    %s96 = scalar_select %p93, %s94, %s95
    %p99 = pneg %p93
    %p100 = scmp.eq.s32.totalorder %s8, 1
    %p101 = por %p99, %p100
    %p102 = scmp.ne.s32.totalorder %s94, %s97
    %p103 = scmp.eq.s32.totalorder %s8, 0
    %p104 = por %p102, %p103
    %p105 = scmp.ne.s32.totalorder %s94, %s97
    %p106 = scmp.eq.s32.totalorder %s13, 1
    %p107 = por %p105, %p106
    %p108 = scmp.ne.s32.totalorder %s97, %s98
    %p109 = scmp.eq.s32.totalorder %s13, 0
    %p110 = por %p108, %p109
    %p111 = scmp.ne.s32.totalorder %s97, %s98
    %p112 = scmp.eq.s32.totalorder %s14, 1
    %p113 = por %p111, %p112
    %p115 = scmp.ne.s32.totalorder %s98, %s114
    %p116 = scmp.eq.s32.totalorder %s14, 0
    %p117 = por %p115, %p116
    %p118 = scmp.le.s32.totalorder 1, %s8
    %p119 = scmp.lt.s32.totalorder %s8, 3
    %p120 = pnand %p118, %p119
    %p121 = pneg %p120
    // Predicated region
    $region9: #{l1_loss.1} parent=5 // pred_check
      _
    $region10: #{l1_loss.1} parent=5 // pred_check_branch
      %123 = sbr.rel (%p120) target = $region12
    $region11: #{l1_loss.1} parent=5 // pred_region
      %s124 = ssub.s32 %s8, 1
    $region12: #{l1_loss.1} parent=5 // pred_fallthru
      _
    %p125 = scmp.lt.s32.totalorder %s8, 2
    // Predicated region
    $region13: #{l1_loss.1} parent=5 // pred_check
      %p126 = pneg %p125
    $region14: #{l1_loss.1} parent=5 // pred_check_branch
      %128 = sbr.rel (%p126) target = $region16
    $region15: #{l1_loss.1} parent=5 // pred_region
      // Predicated region
      $region17: #{l1_loss.1} parent=15 // pred_check
        %p129 = pneg %p46
      $region18: #{l1_loss.1} parent=15 // pred_check_branch
        %131 = sbr.rel (%p129) target = $region20
      $region19: #{l1_loss.1} parent=15 // pred_region
        %s132 = sadd.s32 %s15, %s16
        %p133 = scmp.lt.s32.totalorder %s132, 0
        %s134 = scalar_select %p133, %s132, 0
        %s135 = smul.u32 2, %s134
        %p136 = scmp.lt.s32.totalorder %s135, 1
        %s137 = scalar_select %p136, %s135, 1
        %s138 = smul.addr %s137, 8
        %s139 = scalar_lea.vmem %s0, %s138
        %s140 = sadd.s32 %s15, %s16
        %p141 = scmp.lt.s32.totalorder %s140, 0
        %s142 = scalar_select %p141, %s140, 0
        %s143 = smul.u32 2, %s142
      $region20: #{l1_loss.1} parent=15 // pred_fallthru
        _
      // Predicated region
      $region21: #{l1_loss.1} parent=15 // pred_check
        %p144 = pneg %p78
      $region22: #{l1_loss.1} parent=15 // pred_check_branch
        %146 = sbr.rel (%p144) target = $region24
      $region23: #{l1_loss.1} parent=15 // pred_region
        %s147 = sadd.s32 %s15, %s16
        %p148 = scmp.lt.s32.totalorder %s147, 0
        %s149 = scalar_select %p148, %s147, 0
        %s150 = smul.u32 2, %s149
        %p151 = scmp.lt.s32.totalorder %s150, 1
        %s152 = scalar_select %p151, %s150, 1
        %s153 = smul.addr %s152, 8
        %s154 = scalar_lea.vmem %s1, %s153
        %s155 = sadd.s32 %s15, %s16
        %p156 = scmp.lt.s32.totalorder %s155, 0
        %s157 = scalar_select %p156, %s155, 0
        %s158 = smul.u32 2, %s157
      $region24: #{l1_loss.1} parent=15 // pred_fallthru
        _
    $region16: #{l1_loss.1} parent=5 // pred_fallthru
      _
    %p159 = scmp.le.s32.totalorder 1, %s8
    %p160 = scmp.lt.s32.totalorder %s8, 3
    %p161 = pnand %p159, %p160
    %p162 = pneg %p161
    // Predicated region
    $region25: #{l1_loss.1} parent=5 // pred_check
      _
    $region26: #{l1_loss.1} parent=5 // pred_check_branch
      %164 = sbr.rel (%p161) target = $region28
    $region27: #{l1_loss.1} parent=5 // pred_region
      %s165 = ssub.s32 %s8, 1
      %s166 = sadd.s32 %s17, %s18
      %p167 = scmp.lt.s32.totalorder %s166, 0
      %s168 = scalar_select %p167, %s166, 0
      %s169 = smul.u32 2, %s168
      %p170 = scmp.lt.s32.totalorder %s169, 1
      %s171 = scalar_select %p170, %s169, 1
      %s172 = smul.addr %s171, 8
      %s173 = scalar_lea.vmem %s0, %s172
      %p174 = pneg %p52
      %p175 = pneg %p49
      %s176 = sadd.s32 %s17, %s18
      %p177 = scmp.lt.s32.totalorder %s176, 0
      %s178 = scalar_select %p177, %s176, 0
      %s179 = smul.u32 2, %s178
      %p180 = scmp.lt.s32.totalorder %s179, 1
      %s181 = scalar_select %p180, %s179, 1
      %s182 = smul.addr %s181, 8
      %s183 = scalar_lea.vmem %s1, %s182
      %p184 = pneg %p84
      %p185 = pneg %p81
      %p186 = pneg %p110
      %p187 = pneg %p107
      %p188 = scmp.lt.s32.totalorder %s17, 1
      %s189 = scalar_select %p188, %s17, 1
      %s190 = smul.addr %s189, 8
      %s191 = scalar_lea.vmem %s2, %s190
      %s192 = sadd.s32 %s17, %s18
      %p193 = scmp.lt.s32.totalorder %s192, 0
      %s194 = scalar_select %p193, %s192, 0
      %s195 = smul.u32 2, %s194
      %p196 = scmp.lt.s32.totalorder %s195, 1
      %s197 = scalar_select %p196, %s195, 1
      %s198 = smul.addr %s197, 8
      %s199 = scalar_lea.vmem %s0, %s198
      %s200 = sadd.s32 %s17, %s18
      %p201 = scmp.lt.s32.totalorder %s200, 0
      %s202 = scalar_select %p201, %s200, 0
      %s203 = smul.u32 2, %s202
      %s204 = sadd.s32 %s17, %s18
      %p205 = scmp.lt.s32.totalorder %s204, 0
      %s206 = scalar_select %p205, %s204, 0
      %s207 = smul.u32 2, %s206
      %p208 = scmp.lt.s32.totalorder %s207, 1
      %s209 = scalar_select %p208, %s207, 1
      %s210 = smul.addr %s209, 8
      %s211 = scalar_lea.vmem %s1, %s210
      %s212 = sadd.s32 %s17, %s18
      %p213 = scmp.lt.s32.totalorder %s212, 0
      %s214 = scalar_select %p213, %s212, 0
      %s215 = smul.u32 2, %s214
      %p216 = scmp.lt.s32.totalorder %s17, 1
      %s217 = scalar_select %p216, %s17, 1
      %s218 = smul.addr %s217, 8
      %s219 = scalar_lea.vmem %s2, %s218
      %p220 = scmp.eq.s32.totalorder %s18, 0
      // Predicated region
      $region29: #{l1_loss.1} parent=27 // pred_check
        %p221 = pneg %p220
      $region30: #{l1_loss.1} parent=27 // pred_check_branch
        %223 = sbr.rel (%p221) target = $region32
      $region31: #{l1_loss.1} parent=27 // pred_region
        %224 = vst [vmem:[#allocation2] sm:$0xff] 0.0
        %225 = vst [vmem:[#allocation2 + $0x8] sm:$0xff] 0.0
      $region32: #{l1_loss.1} parent=27 // pred_fallthru
        _
      %v226 = vld [vmem:[%s199] sm:$0xff]
      %v227 = vld [vmem:[%s199 + $0x8] sm:$0xff]
      %v228 = vld [vmem:[%s211] sm:$0xff]
      %v229 = vld [vmem:[%s211 + $0x8] sm:$0xff]
      %v230 = vsub.f32 %v226, %v228
      %v231 = vsub.f32 %v227, %v229
      %v232 = vand.u32 2147483647, %v230
      %v233 = vand.u32 2147483647, %v231
      %s234 = sadd.s32 %s17, %s18
      %s235 = smul.u32 %s234, 16
      %v236 = vlaneseq
      %v237 = vshrl.u32 %v236, 7
      %v238 = vadd.s32 %v237, 8
      %v239 = vstv %s235
      %v240 = vadd.s32 %v239, %v237
      %v241 = vadd.s32 %v239, %v238
      %v242 = vld [vmem:[#allocation2] sm:$0xff]
      %v243 = vld [vmem:[#allocation2 + $0x8] sm:$0xff]
      %vm244 = vcmp.lt.s32.totalorder %v240, 16
      %vm245 = vcmp.lt.s32.totalorder %v241, 16
      %v246 = vsel %vm244, %v232, 0.0
      %v247 = vsel %vm245, %v233, 0.0
      %v248 = vadd.f32 %v242, %v246
      %v249 = vadd.f32 %v243, %v247
      %250 = vst [vmem:[#allocation2] sm:$0xff] %v248
      %251 = vst [vmem:[#allocation2 + $0x8] sm:$0xff] %v249
      // Predicated region
      $region33: #{l1_loss.1} parent=27 // pred_check
        %p252 = pneg %p220
      $region34: #{l1_loss.1} parent=27 // pred_check_branch
        %254 = sbr.rel (%p252) target = $region36
      $region35: #{l1_loss.1} parent=27 // pred_region
        %v255 = vld [vmem:[#allocation2] sm:$0xff]
        %v256 = vld [vmem:[#allocation2 + $0x8] sm:$0xff]
        %v257 = vadd.f32 %v255, %v256
        %258 = vst [vmem:[%s219] sm:$0xff] %v257
      $region36: #{l1_loss.1} parent=27 // pred_fallthru
        _
      %p259 = scmp.lt.s32.totalorder %s17, 1
      %s260 = scalar_select %p259, %s17, 1
      %s261 = smul.addr %s260, 8
      %s262 = scalar_lea.vmem %s2, %s261
      // Predicated region
      $region37: #{l1_loss.1} parent=27 // pred_check
        %p263 = pneg %p107
      $region38: #{l1_loss.1} parent=27 // pred_check_branch
        %265 = sbr.rel (%p263) target = $region40
      $region39: #{l1_loss.1} parent=27 // pred_region
        _
      $region40: #{l1_loss.1} parent=27 // pred_fallthru
        _
    $region28: #{l1_loss.1} parent=5 // pred_fallthru
      _
    %p266 = scmp.le.s32.totalorder 2, %s8
    // Predicated region
    $region41: #{l1_loss.1} parent=5 // pred_check
      %p267 = pneg %p266
    $region42: #{l1_loss.1} parent=5 // pred_check_branch
      %269 = sbr.rel (%p267) target = $region44
    $region43: #{l1_loss.1} parent=5 // pred_region
      %s270 = ssub.s32 %s8, 2
      // Predicated region
      $region45: #{l1_loss.1} parent=43 // pred_check
        %p271 = pneg %p113
      $region46: #{l1_loss.1} parent=43 // pred_check_branch
        %273 = sbr.rel (%p271) target = $region48
      $region47: #{l1_loss.1} parent=43 // pred_region
        %p274 = scmp.lt.s32.totalorder %s19, 1
        %s275 = scalar_select %p274, %s19, 1
        %s276 = smul.addr %s275, 8
        %s277 = scalar_lea.vmem %s2, %s276
      $region48: #{l1_loss.1} parent=43 // pred_fallthru
        _
    $region44: #{l1_loss.1} parent=5 // pred_fallthru
      _
  $region6: #{l1_loss.1} parent=0 // loop_footer
    %s12 = sadd.s32 1, %s8
  $region7: #{l1_loss.1} parent=0 // loop_footer_branch
    %7 = sbr.rel target = $region3
  $region8: #{l1_loss.1} parent=0 // loop_exit
    _

</llo_original>
